<compile_context>
chip_gen: v5e
topology: v5e:2x2
jax: 0.10.0
libtpu: 0.0.40
codegen_flags: <defaults>
</compile_context>

<pallas_src>
import jax
import jax.numpy as jnp
import numpy as np
from jax import lax
from jax.experimental import pallas as pl
from jax.experimental.pallas import tpu as pltpu

BN_EPS = 1e-5
LANE = 128
SUBLANE = 8
VMEM_LIMIT = 32 * 1024 * 1024


def _round_up(x, m):
    return (x + m - 1) // m * m


def _pick_mt(m_rows, block_m):
    """Largest Mt <= block_m that is a multiple of 16 and (preferably) divides M."""
    target = min(block_m, _round_up(m_rows, 16))
    for cand in range(target - target % 16, 15, -16):
        if m_rows % cand == 0:
            return cand
    return max(16, target - target % 16)


# ---------------------------------------------------------------------------
# Pass 1: conv im2col GEMM -> per-block BN partial statistics only
#   stats_ref: (8, Cpad)  row 0 = channel sum, row 1 = channel sum-of-squares
# ---------------------------------------------------------------------------
def conv_stats_kernel(p_ref, w_ref, stats_ref):
    acc = jnp.dot(p_ref[...], w_ref[...], preferred_element_type=jnp.float32)
    s = jnp.sum(acc, axis=0, keepdims=True)            # (1, Cpad), f32
    sq = jnp.sum(acc * acc, axis=0, keepdims=True)     # (1, Cpad), f32
    rows = lax.broadcasted_iota(jnp.int32, stats_ref.shape, 0)
    stats_ref[...] = jnp.where(rows == 0, s, jnp.where(rows == 1, sq, 0.0))


# ---------------------------------------------------------------------------
# Pass 2: recompute conv GEMM, apply precomputed BN scale/shift + ReLU
# ---------------------------------------------------------------------------
def conv_bn_relu_kernel(p_ref, w_ref, scale_ref, shift_ref, out_ref):
    acc = jnp.dot(p_ref[...], w_ref[...], preferred_element_type=jnp.float32)
    out_ref[...] = jnp.maximum(acc * scale_ref[...] + shift_ref[...], 0.0)


# ---------------------------------------------------------------------------
# Wrapper: NCDHW -> im2col (bf16, lane-dense) -> pallas x2 -> NCDHW
# ---------------------------------------------------------------------------
def conv_bn_relu(x_ncdhw, w_oidhw, gamma, beta, *, block_m=2048):
    x = jnp.transpose(x_ncdhw, (0, 2, 3, 4, 1)).astype(jnp.bfloat16)  # NDHWC
    N, D, H, W, Cin = x.shape
    Cout = w_oidhw.shape[0]
    K = 27 * Cin
    # K-dense GEMM: pad K to 128, or to a 256 multiple once K exceeds 128
    # (keeps the 256-wide MXU on v6e/v7x efficiently fed as Cin grows).
    Kpad = LANE if K <= LANE else _round_up(K, 2 * LANE)
    Cpad = _round_up(Cout, LANE)
    M = N * D * H * W

    # im2col in one shot at (M, Kpad): zero slab folded into the concatenate,
    # ordering (kd, kh, kw, cin) fastest-to-slowest matching the folded weight.
    xpad = jnp.pad(x, ((0, 0), (1, 1), (1, 1), (1, 1), (0, 0)))
    cols = [xpad[:, kd:kd + D, kh:kh + H, kw:kw + W, :]
            for kd in range(3) for kh in range(3) for kw in range(3)]
    if Kpad > K:
        cols.append(jnp.zeros((N, D, H, W, Kpad - K), jnp.bfloat16))
    patches = jnp.concatenate(cols, axis=-1).reshape(M, Kpad)

    Mt = _pick_mt(M, block_m)
    Mpad = _round_up(M, Mt)                 # zero rows contribute 0 to stats
    nblk = Mpad // Mt
    if Mpad > M:
        patches = jnp.pad(patches, ((0, Mpad - M), (0, 0)))

    # Folded weight: (kd, kh, kw, Cin, Cout) -> (Kpad, Cpad), bf16.
    wk = jnp.transpose(w_oidhw, (2, 3, 4, 1, 0)).astype(jnp.float32)
    wk = jnp.pad(wk.reshape(K, Cout), ((0, Kpad - K), (0, Cpad - Cout)))
    wk = wk.astype(jnp.bfloat16)

    cparams = pltpu.CompilerParams(dimension_semantics=("parallel",),
                                   vmem_limit_bytes=VMEM_LIMIT)

    # ---- Pass 1: per-block partial BN statistics ----------------------------
    stats = pl.pallas_call(
        conv_stats_kernel,
        out_shape=jax.ShapeDtypeStruct((SUBLANE * nblk, Cpad), jnp.float32),
        grid_spec=pltpu.PrefetchScalarGridSpec(
            num_scalar_prefetch=0,
            grid=(nblk,),
            in_specs=[pl.BlockSpec((Mt, Kpad), lambda i: (i, 0)),
                      pl.BlockSpec((Kpad, Cpad), lambda i: (0, 0))],
            out_specs=pl.BlockSpec((SUBLANE, Cpad), lambda i: (i, 0))),
        compiler_params=cparams,
    )(patches, wk)

    # ---- Finalize BN stats on tiny arrays in the wrapper (all f32) ----------
    stats = stats.reshape(nblk, SUBLANE, Cpad)
    total = jnp.sum(stats[:, 0, :], axis=0)                  # (Cpad,)
    totalsq = jnp.sum(stats[:, 1, :], axis=0)                # (Cpad,)
    inv_m = jnp.float32(1.0 / M)
    mean = total * inv_m
    var = jnp.maximum(totalsq * inv_m - mean * mean, 0.0)    # biased var
    gpad = jnp.pad(gamma.astype(jnp.float32), (0, Cpad - Cout))
    bpad = jnp.pad(beta.astype(jnp.float32), (0, Cpad - Cout))
    scale = (gpad * lax.rsqrt(var + BN_EPS)).reshape(1, Cpad)
    shift = (bpad - mean * scale[0]).reshape(1, Cpad)
    # TODO(synk): BatchNorm running_mean/running_var update (momentum=0.05) is
    # a training-time module-state side effect; the forward output is unaffected.

    # ---- Pass 2: recompute GEMM, apply scale/shift + ReLU --------------------
    y = pl.pallas_call(
        conv_bn_relu_kernel,
        out_shape=jax.ShapeDtypeStruct((Mpad, Cpad), jnp.float32),
        grid_spec=pltpu.PrefetchScalarGridSpec(
            num_scalar_prefetch=0,
            grid=(nblk,),
            in_specs=[pl.BlockSpec((Mt, Kpad), lambda i: (i, 0)),
                      pl.BlockSpec((Kpad, Cpad), lambda i: (0, 0)),
                      pl.BlockSpec((1, Cpad), lambda i: (0, 0)),
                      pl.BlockSpec((1, Cpad), lambda i: (0, 0))],
            out_specs=pl.BlockSpec((Mt, Cpad), lambda i: (i, 0))),
        compiler_params=cparams,
    )(patches, wk, scale, shift)

    y = y[:M, :Cout].reshape(N, D, H, W, Cout)
    return jnp.transpose(y, (0, 4, 1, 2, 3))  # back to NCDHW


# ---------------------------------------------------------------------------
# Pure-JAX reference matching PyTorch training-mode forward
# ---------------------------------------------------------------------------
def reference(x_ncdhw, w_oidhw, gamma, beta):
    x = jnp.transpose(x_ncdhw, (0, 2, 3, 4, 1))
    w = jnp.transpose(w_oidhw, (2, 3, 4, 1, 0))
    out = lax.conv_general_dilated(
        x, w, window_strides=(1, 1, 1),
        padding=((1, 1), (1, 1), (1, 1)),
        dimension_numbers=("NDHWC", "DHWIO", "NDHWC"))
    mean = out.mean(axis=(0, 1, 2, 3), keepdims=True)
    var = ((out - mean) ** 2).mean(axis=(0, 1, 2, 3), keepdims=True)
    y = (out - mean) * lax.rsqrt(var + BN_EPS) * gamma + beta
    y = jnp.maximum(y, 0.0)
    return jnp.transpose(y, (0, 4, 1, 2, 3))


if __name__ == "__main__":
    # Small shapes: batch=2, in_channels=4, out_channels=8, spatial=8^3.
    N, Cin, Cout, D, H, W = 2, 4, 8, 8, 8, 8

    key = jax.random.PRNGKey(0)
    kx, kw, kg, kb = jax.random.split(key, 4)

    x = jax.random.normal(kx, (N, Cin, D, H, W), dtype=jnp.float32)
    # Conv3d weight: (out_channels, in_channels, kD, kH, kW), bias=False.
    fan_in = Cin * 3 * 3 * 3
    bound = 1.0 / np.sqrt(fan_in)
    w = jax.random.uniform(kw, (Cout, Cin, 3, 3, 3),
                           minval=-bound, maxval=bound, dtype=jnp.float32)
    # BatchNorm3d affine params (perturbed to exercise the affine path).
    gamma = 1.0 + 0.1 * jax.random.normal(kg, (Cout,), dtype=jnp.float32)
    beta = 0.1 * jax.random.normal(kb, (Cout,), dtype=jnp.float32)

    out = conv_bn_relu(x, w, gamma, beta)
    out = jax.block_until_ready(out)

    ref = jax.block_until_ready(reference(x, w, gamma, beta))
    np.testing.assert_allclose(np.asarray(out), np.asarray(ref),
                               rtol=1e-2, atol=1e-2)

    print("KERNEL_OK")
</pallas_src>

<mosaic_0001>
module attributes {stable_mosaic.version = 11 : i64} {
  func.func @conv_stats_kernel(%arg0: i32, %arg1: memref<1024x128xbf16, #tpu.memory_space<vmem>>, %arg2: memref<128x128xbf16, #tpu.memory_space<vmem>>, %arg3: memref<8x128xf32, #tpu.memory_space<vmem>>) attributes {dimension_semantics = [#tpu.dimension_semantics<parallel>], iteration_bounds = array<i64: 1>, scalar_prefetch = 0 : i64, scratch_operands = 0 : i64, tpu.core_type = #tpu.core_type<tc>, window_params = [{transform_indices = @transform_0, window_bounds = array<i64: 1024, 128>}, {pipeline_mode = #tpu.pipeline_mode<synchronous>, transform_indices = @transform_1, window_bounds = array<i64: 128, 128>}, {transform_indices = @transform_2, window_bounds = array<i64: 8, 128>}]} {
    %c0 = arith.constant 0 : index
    %c0_0 = arith.constant 0 : index
    %0 = vector.load %arg1[%c0, %c0_0] : memref<1024x128xbf16, #tpu.memory_space<vmem>>, vector<1024x128xbf16>
    %c0_1 = arith.constant 0 : index
    %c0_2 = arith.constant 0 : index
    %1 = vector.load %arg2[%c0_1, %c0_2] : memref<128x128xbf16, #tpu.memory_space<vmem>>, vector<128x128xbf16>
    %cst = arith.constant dense<0.000000e+00> : vector<1024x128xf32>
    %2 = tpu.matmul %0, %1, %cst {dimension_numbers = #tpu.dot_dimension_numbers<[1], [0], [0], [1], [0, 0, 1, 1], [], []>} : vector<1024x128xbf16>, vector<128x128xbf16>, vector<1024x128xf32> -> vector<1024x128xf32>
    %cst_3 = arith.constant dense<0.000000e+00> : vector<128xf32>
    %3 = vector.multi_reduction <add>, %2, %cst_3 [0] : vector<1024x128xf32> to vector<128xf32>
    %4 = vector.shape_cast %3 : vector<128xf32> to vector<1x128xf32>
    %5 = arith.mulf %2, %2 : vector<1024x128xf32>
    %cst_4 = arith.constant dense<0.000000e+00> : vector<128xf32>
    %6 = vector.multi_reduction <add>, %5, %cst_4 [0] : vector<1024x128xf32> to vector<128xf32>
    %7 = vector.shape_cast %6 : vector<128xf32> to vector<1x128xf32>
    %8 = tpu.iota {dimensions = array<i32: 0>} : vector<8x128xi32>
    %c0_i32 = arith.constant 0 : i32
    %9 = vector.broadcast %c0_i32 : i32 to vector<8x128xi32>
    %10 = arith.cmpi eq, %8, %9 : vector<8x128xi32>
    %c1_i32 = arith.constant 1 : i32
    %11 = vector.broadcast %c1_i32 : i32 to vector<8x128xi32>
    %12 = arith.cmpi eq, %8, %11 : vector<8x128xi32>
    %cst_5 = arith.constant 0.000000e+00 : f32
    %13 = vector.shape_cast %7 : vector<1x128xf32> to vector<1x128xf32>
    %14 = vector.broadcast %13 : vector<1x128xf32> to vector<8x128xf32>
    %15 = vector.broadcast %cst_5 : f32 to vector<8x128xf32>
    %16 = arith.select %12, %14, %15 : vector<8x128xi1>, vector<8x128xf32>
    %17 = vector.shape_cast %4 : vector<1x128xf32> to vector<1x128xf32>
    %18 = vector.broadcast %17 : vector<1x128xf32> to vector<8x128xf32>
    %19 = arith.select %10, %18, %16 : vector<8x128xi1>, vector<8x128xf32>
    %c0_6 = arith.constant 0 : index
    %c0_7 = arith.constant 0 : index
    %20 = vector.load %arg3[%c0_6, %c0_7] : memref<8x128xf32, #tpu.memory_space<vmem>>, vector<8x128xf32>
    tpu.vector_store %arg3[%c0_6, %c0_7], %19 {strides = array<i32>} : memref<8x128xf32, #tpu.memory_space<vmem>>, vector<8x128xf32>,
    return
  }
  func.func @transform_0(%arg0: i32) -> (i32, i32) {
    %c0_i32 = arith.constant 0 : i32
    %c0_i32_0 = arith.constant 0 : i32
    return %arg0, %c0_i32 : i32, i32
  }
  func.func @transform_1(%arg0: i32) -> (i32, i32) {
    %c0_i32 = arith.constant 0 : i32
    %c0_i32_0 = arith.constant 0 : i32
    %c0_i32_1 = arith.constant 0 : i32
    return %c0_i32, %c0_i32_0 : i32, i32
  }
  func.func @transform_2(%arg0: i32) -> (i32, i32) {
    %c0_i32 = arith.constant 0 : i32
    %c0_i32_0 = arith.constant 0 : i32
    return %arg0, %c0_i32 : i32, i32
  }
}

</mosaic_0001>

<llo_original>
// kernel: tpu_custom_call.1
$region0: #{tpu_custom_call.1}
  #allocation0 [shape = 'u32[]', space=smem, size = 0x4, offset = 0x4, fixed_abs, tag = 'smem constant byte address 0x4 - core index']
  #allocation1 [shape = 'u32[72,128]{1,0:T(1,128)}', space=vmem, size = 0x9000, scoped, tag = 'internal scratch']
  %s0 = inlined_call_operand.hbm [shape: bf16[1024,128], index: 0, kind: input, shape index: {}]
  %s1 = inlined_call_operand.hbm [shape: bf16[128,128], index: 1, kind: input, shape index: {}]
  %s2 = inlined_call_operand.hbm [shape: f32[8,128], index: 2, kind: output, shape index: {}]
  %s3 = sld [smem:[#allocation0]]
  $region26: #{tpu_custom_call.1} parent=0
    _
  %s5 = ssub.s32 1, %s3
  %s6 = scalar_select 0, %s5, %s3
  $region1: #{tpu_custom_call.1} parent=0
    #allocation2 [shape = 'u8[262144]{0}', space=vmem, size = 0x40000, scoped, tag = 'input window, operand 0, single buffered']
    #allocation3 [shape = 's32[1]{0}', space=sflag, size = 0x4, scoped, tag = 'scoped memory for tpu_custom_call.1']
    #allocation4 [shape = 's32[1]{0}', space=sflag, size = 0x4, scoped, tag = 'scoped memory for tpu_custom_call.1']
    #allocation5 [shape = 'u8[32768]{0}', space=vmem, size = 0x8000, scoped, tag = 'input window, operand 1, single buffered']
    #allocation6 [shape = 's32[1]{0}', space=sflag, size = 0x4, scoped, tag = 'scoped memory for tpu_custom_call.1']
    #allocation7 [shape = 'u8[4096]{0}', space=vmem, size = 0x1000, scoped, tag = 'output window, operand 0, single buffered']
    %7 = vsyncpa [#allocation3], 0
    %8 = vsyncpa [#allocation6], 0
    %9 = vsyncpa [#allocation4], 0
    // Predicated region
    $region2: #{tpu_custom_call.1} parent=1 // pred_check
      _
    $region3: #{tpu_custom_call.1} parent=1 // pred_check_branch
      %11 = sbr.rel (0) target = $region5
    $region4: #{tpu_custom_call.1} parent=1 // pred_region
      %13 = vsyncadd [#allocation3], 0
      %s14 = sshll.u32 %s0, 4
      %s15 = int_to_ptr.hbm [resolvable:$true] %s14
      %s16 = sshll.u32 [#allocation2], 4
      %s17 = int_to_ptr.vmem [resolvable:$true] %s16
      %22 = dma.hbm_to_vmem [thread:$0]  %s15, 8192, %s17, [#allocation3], 64, 64, 4
    $region5: #{tpu_custom_call.1} parent=1 // pred_fallthru
      _
    // Predicated region
    $region6: #{tpu_custom_call.1} parent=1 // pred_check
      _
    $region7: #{tpu_custom_call.1} parent=1 // pred_check_branch
      %24 = sbr.rel (0) target = $region9
    $region8: #{tpu_custom_call.1} parent=1 // pred_region
      %26 = vsyncadd [#allocation6], 0
      %s27 = sshll.u32 %s1, 4
      %s28 = int_to_ptr.hbm [resolvable:$true] %s27
      %s29 = sshll.u32 [#allocation5], 4
      %s30 = int_to_ptr.vmem [resolvable:$true] %s29
      %35 = dma.hbm_to_vmem [thread:$0]  %s28, 1024, %s30, [#allocation6], 64, 64, 4
    $region9: #{tpu_custom_call.1} parent=1 // pred_fallthru
      _
    // Predicated region
    $region10: #{tpu_custom_call.1} parent=1 // pred_check
      _
    $region11: #{tpu_custom_call.1} parent=1 // pred_check_branch
      %37 = sbr.rel (0) target = $region13
    $region12: #{tpu_custom_call.1} parent=1 // pred_region
      %39 = dma.done [#allocation3], 8192
    $region13: #{tpu_custom_call.1} parent=1 // pred_fallthru
      _
    // Predicated region
    $region14: #{tpu_custom_call.1} parent=1 // pred_check
      _
    $region15: #{tpu_custom_call.1} parent=1 // pred_check_branch
      %41 = sbr.rel (0) target = $region17
    $region16: #{tpu_custom_call.1} parent=1 // pred_region
      %43 = dma.done [#allocation6], 1024
    $region17: #{tpu_custom_call.1} parent=1 // pred_fallthru
      _
    %v44 = vld [vmem:[#allocation2] sm:$0xf]
    %v45 = vld [vmem:[#allocation2 + $0x4] sm:$0xf]
    %v46 = vld [vmem:[#allocation2 + $0x8] sm:$0xf]
    %v47 = vld [vmem:[#allocation2 + $0xc] sm:$0xf]
    %v48 = vld [vmem:[#allocation2 + $0x10] sm:$0xf]
    %v49 = vld [vmem:[#allocation2 + $0x14] sm:$0xf]
    %v50 = vld [vmem:[#allocation2 + $0x18] sm:$0xf]
    %v51 = vld [vmem:[#allocation2 + $0x1c] sm:$0xf]
    %v52 = vld [vmem:[#allocation2 + $0x20] sm:$0xf]
    %v53 = vld [vmem:[#allocation2 + $0x24] sm:$0xf]
    %v54 = vld [vmem:[#allocation2 + $0x28] sm:$0xf]
    %v55 = vld [vmem:[#allocation2 + $0x2c] sm:$0xf]
    %v56 = vld [vmem:[#allocation2 + $0x30] sm:$0xf]
    %v57 = vld [vmem:[#allocation2 + $0x34] sm:$0xf]
    %v58 = vld [vmem:[#allocation2 + $0x38] sm:$0xf]
    %v59 = vld [vmem:[#allocation2 + $0x3c] sm:$0xf]
    %v60 = vld [vmem:[#allocation2 + $0x40] sm:$0xf]
    %v61 = vld [vmem:[#allocation2 + $0x44] sm:$0xf]
    %v62 = vld [vmem:[#allocation2 + $0x48] sm:$0xf]
    %v63 = vld [vmem:[#allocation2 + $0x4c] sm:$0xf]
    %v64 = vld [vmem:[#allocation2 + $0x50] sm:$0xf]
    %v65 = vld [vmem:[#allocation2 + $0x54] sm:$0xf]
    %v66 = vld [vmem:[#allocation2 + $0x58] sm:$0xf]
    %v67 = vld [vmem:[#allocation2 + $0x5c] sm:$0xf]
    %v68 = vld [vmem:[#allocation2 + $0x60] sm:$0xf]
    %v69 = vld [vmem:[#allocation2 + $0x64] sm:$0xf]
    %v70 = vld [vmem:[#allocation2 + $0x68] sm:$0xf]
    %v71 = vld [vmem:[#allocation2 + $0x6c] sm:$0xf]
    %v72 = vld [vmem:[#allocation2 + $0x70] sm:$0xf]
    %v73 = vld [vmem:[#allocation2 + $0x74] sm:$0xf]
    %v74 = vld [vmem:[#allocation2 + $0x78] sm:$0xf]
    %v75 = vld [vmem:[#allocation2 + $0x7c] sm:$0xf]
    %v76 = vld [vmem:[#allocation2 + $0x80] sm:$0xf]
    %v77 = vld [vmem:[#allocation2 + $0x84] sm:$0xf]
    %v78 = vld [vmem:[#allocation2 + $0x88] sm:$0xf]
    %v79 = vld [vmem:[#allocation2 + $0x8c] sm:$0xf]
    %v80 = vld [vmem:[#allocation2 + $0x90] sm:$0xf]
    %v81 = vld [vmem:[#allocation2 + $0x94] sm:$0xf]
    %v82 = vld [vmem:[#allocation2 + $0x98] sm:$0xf]
    %v83 = vld [vmem:[#allocation2 + $0x9c] sm:$0xf]
    %v84 = vld [vmem:[#allocation2 + $0xa0] sm:$0xf]
    %v85 = vld [vmem:[#allocation2 + $0xa4] sm:$0xf]
    %v86 = vld [vmem:[#allocation2 + $0xa8] sm:$0xf]
    %v87 = vld [vmem:[#allocation2 + $0xac] sm:$0xf]
    %v88 = vld [vmem:[#allocation2 + $0xb0] sm:$0xf]
    %v89 = vld [vmem:[#allocation2 + $0xb4] sm:$0xf]
    %v90 = vld [vmem:[#allocation2 + $0xb8] sm:$0xf]
    %v91 = vld [vmem:[#allocation2 + $0xbc] sm:$0xf]
    %v92 = vld [vmem:[#allocation2 + $0xc0] sm:$0xf]
    %v93 = vld [vmem:[#allocation2 + $0xc4] sm:$0xf]
    %v94 = vld [vmem:[#allocation2 + $0xc8] sm:$0xf]
    %v95 = vld [vmem:[#allocation2 + $0xcc] sm:$0xf]
    %v96 = vld [vmem:[#allocation2 + $0xd0] sm:$0xf]
    %v97 = vld [vmem:[#allocation2 + $0xd4] sm:$0xf]
    %v98 = vld [vmem:[#allocation2 + $0xd8] sm:$0xf]
    %v99 = vld [vmem:[#allocation2 + $0xdc] sm:$0xf]
    %v100 = vld [vmem:[#allocation2 + $0xe0] sm:$0xf]
    %v101 = vld [vmem:[#allocation2 + $0xe4] sm:$0xf]
    %v102 = vld [vmem:[#allocation2 + $0xe8] sm:$0xf]
    %v103 = vld [vmem:[#allocation2 + $0xec] sm:$0xf]
    %v104 = vld [vmem:[#allocation2 + $0xf0] sm:$0xf]
    %v105 = vld [vmem:[#allocation2 + $0xf4] sm:$0xf]
    %v106 = vld [vmem:[#allocation2 + $0xf8] sm:$0xf]
    %v107 = vld [vmem:[#allocation2 + $0xfc] sm:$0xf]
    %v108 = vld [vmem:[#allocation2 + $0x100] sm:$0xf]
    %v109 = vld [vmem:[#allocation2 + $0x104] sm:$0xf]
    %v110 = vld [vmem:[#allocation2 + $0x108] sm:$0xf]
    %v111 = vld [vmem:[#allocation2 + $0x10c] sm:$0xf]
    %v112 = vld [vmem:[#allocation2 + $0x110] sm:$0xf]
    %v113 = vld [vmem:[#allocation2 + $0x114] sm:$0xf]
    %v114 = vld [vmem:[#allocation2 + $0x118] sm:$0xf]
    %v115 = vld [vmem:[#allocation2 + $0x11c] sm:$0xf]
    %v116 = vld [vmem:[#allocation2 + $0x120] sm:$0xf]
    %v117 = vld [vmem:[#allocation2 + $0x124] sm:$0xf]
    %v118 = vld [vmem:[#allocation2 + $0x128] sm:$0xf]
    %v119 = vld [vmem:[#allocation2 + $0x12c] sm:$0xf]
    %v120 = vld [vmem:[#allocation2 + $0x130] sm:$0xf]
    %v121 = vld [vmem:[#allocation2 + $0x134] sm:$0xf]
    %v122 = vld [vmem:[#allocation2 + $0x138] sm:$0xf]
    %v123 = vld [vmem:[#allocation2 + $0x13c] sm:$0xf]
    %v124 = vld [vmem:[#allocation2 + $0x140] sm:$0xf]
    %v125 = vld [vmem:[#allocation2 + $0x144] sm:$0xf]
    %v126 = vld [vmem:[#allocation2 + $0x148] sm:$0xf]
    %v127 = vld [vmem:[#allocation2 + $0x14c] sm:$0xf]
    %v128 = vld [vmem:[#allocation2 + $0x150] sm:$0xf]
    %v129 = vld [vmem:[#allocation2 + $0x154] sm:$0xf]
    %v130 = vld [vmem:[#allocation2 + $0x158] sm:$0xf]
    %v131 = vld [vmem:[#allocation2 + $0x15c] sm:$0xf]
    %v132 = vld [vmem:[#allocation2 + $0x160] sm:$0xf]
    %v133 = vld [vmem:[#allocation2 + $0x164] sm:$0xf]
    %v134 = vld [vmem:[#allocation2 + $0x168] sm:$0xf]
    %v135 = vld [vmem:[#allocation2 + $0x16c] sm:$0xf]
    %v136 = vld [vmem:[#allocation2 + $0x170] sm:$0xf]
    %v137 = vld [vmem:[#allocation2 + $0x174] sm:$0xf]
    %v138 = vld [vmem:[#allocation2 + $0x178] sm:$0xf]
    %v139 = vld [vmem:[#allocation2 + $0x17c] sm:$0xf]
    %v140 = vld [vmem:[#allocation2 + $0x180] sm:$0xf]
    %v141 = vld [vmem:[#allocation2 + $0x184] sm:$0xf]
    %v142 = vld [vmem:[#allocation2 + $0x188] sm:$0xf]
    %v143 = vld [vmem:[#allocation2 + $0x18c] sm:$0xf]
    %v144 = vld [vmem:[#allocation2 + $0x190] sm:$0xf]
    %v145 = vld [vmem:[#allocation2 + $0x194] sm:$0xf]
    %v146 = vld [vmem:[#allocation2 + $0x198] sm:$0xf]
    %v147 = vld [vmem:[#allocation2 + $0x19c] sm:$0xf]
    %v148 = vld [vmem:[#allocation2 + $0x1a0] sm:$0xf]
    %v149 = vld [vmem:[#allocation2 + $0x1a4] sm:$0xf]
    %v150 = vld [vmem:[#allocation2 + $0x1a8] sm:$0xf]
    %v151 = vld [vmem:[#allocation2 + $0x1ac] sm:$0xf]
    %v152 = vld [vmem:[#allocation2 + $0x1b0] sm:$0xf]
    %v153 = vld [vmem:[#allocation2 + $0x1b4] sm:$0xf]
    %v154 = vld [vmem:[#allocation2 + $0x1b8] sm:$0xf]
    %v155 = vld [vmem:[#allocation2 + $0x1bc] sm:$0xf]
    %v156 = vld [vmem:[#allocation2 + $0x1c0] sm:$0xf]
    %v157 = vld [vmem:[#allocation2 + $0x1c4] sm:$0xf]
    %v158 = vld [vmem:[#allocation2 + $0x1c8] sm:$0xf]
    %v159 = vld [vmem:[#allocation2 + $0x1cc] sm:$0xf]
    %v160 = vld [vmem:[#allocation2 + $0x1d0] sm:$0xf]
    %v161 = vld [vmem:[#allocation2 + $0x1d4] sm:$0xf]
    %v162 = vld [vmem:[#allocation2 + $0x1d8] sm:$0xf]
    %v163 = vld [vmem:[#allocation2 + $0x1dc] sm:$0xf]
    %v164 = vld [vmem:[#allocation2 + $0x1e0] sm:$0xf]
    %v165 = vld [vmem:[#allocation2 + $0x1e4] sm:$0xf]
    %v166 = vld [vmem:[#allocation2 + $0x1e8] sm:$0xf]
    %v167 = vld [vmem:[#allocation2 + $0x1ec] sm:$0xf]
    %v168 = vld [vmem:[#allocation2 + $0x1f0] sm:$0xf]
    %v169 = vld [vmem:[#allocation2 + $0x1f4] sm:$0xf]
    %v170 = vld [vmem:[#allocation2 + $0x1f8] sm:$0xf]
    %v171 = vld [vmem:[#allocation2 + $0x1fc] sm:$0xf]
    %v172 = vld [vmem:[#allocation5] sm:$0xf]
    %v173 = vld [vmem:[#allocation5 + $0x4] sm:$0xf]
    %v174 = vld [vmem:[#allocation5 + $0x8] sm:$0xf]
    %v175 = vld [vmem:[#allocation5 + $0xc] sm:$0xf]
    %v176 = vld [vmem:[#allocation5 + $0x10] sm:$0xf]
    %v177 = vld [vmem:[#allocation5 + $0x14] sm:$0xf]
    %v178 = vld [vmem:[#allocation5 + $0x18] sm:$0xf]
    %v179 = vld [vmem:[#allocation5 + $0x1c] sm:$0xf]
    %v180 = vld [vmem:[#allocation5 + $0x20] sm:$0xf]
    %v181 = vld [vmem:[#allocation5 + $0x24] sm:$0xf]
    %v182 = vld [vmem:[#allocation5 + $0x28] sm:$0xf]
    %v183 = vld [vmem:[#allocation5 + $0x2c] sm:$0xf]
    %v184 = vld [vmem:[#allocation5 + $0x30] sm:$0xf]
    %v185 = vld [vmem:[#allocation5 + $0x34] sm:$0xf]
    %v186 = vld [vmem:[#allocation5 + $0x38] sm:$0xf]
    %v187 = vld [vmem:[#allocation5 + $0x3c] sm:$0xf]
    %v316 = vunpack.c.l.b16 %v44
    %v317 = vunpack.c.l.b16 %v45
    %v318 = vunpack.c.l.b16 %v46
    %v319 = vunpack.c.l.b16 %v47
    %v320 = vunpack.c.l.b16 %v48
    %v321 = vunpack.c.l.b16 %v49
    %v322 = vunpack.c.l.b16 %v50
    %v323 = vunpack.c.l.b16 %v51
    %v324 = vunpack.c.l.b16 %v52
    %v325 = vunpack.c.l.b16 %v53
    %v326 = vunpack.c.l.b16 %v54
    %v327 = vunpack.c.l.b16 %v55
    %v328 = vunpack.c.l.b16 %v56
    %v329 = vunpack.c.l.b16 %v57
    %v330 = vunpack.c.l.b16 %v58
    %v331 = vunpack.c.l.b16 %v59
    %v332 = vunpack.c.l.b16 %v60
    %v333 = vunpack.c.l.b16 %v61
    %v334 = vunpack.c.l.b16 %v62
    %v335 = vunpack.c.l.b16 %v63
    %v336 = vunpack.c.l.b16 %v64
    %v337 = vunpack.c.l.b16 %v65
    %v338 = vunpack.c.l.b16 %v66
    %v339 = vunpack.c.l.b16 %v67
    %v340 = vunpack.c.l.b16 %v68
    %v341 = vunpack.c.l.b16 %v69
    %v342 = vunpack.c.l.b16 %v70
    %v343 = vunpack.c.l.b16 %v71
    %v344 = vunpack.c.l.b16 %v72
    %v345 = vunpack.c.l.b16 %v73
    %v346 = vunpack.c.l.b16 %v74
    %v347 = vunpack.c.l.b16 %v75
    %v348 = vunpack.c.l.b16 %v76
    %v349 = vunpack.c.l.b16 %v77
    %v350 = vunpack.c.l.b16 %v78
    %v351 = vunpack.c.l.b16 %v79
    %v352 = vunpack.c.l.b16 %v80
    %v353 = vunpack.c.l.b16 %v81
    %v354 = vunpack.c.l.b16 %v82
    %v355 = vunpack.c.l.b16 %v83
    %v356 = vunpack.c.l.b16 %v84
    %v357 = vunpack.c.l.b16 %v85
    %v358 = vunpack.c.l.b16 %v86
    %v359 = vunpack.c.l.b16 %v87
    %v360 = vunpack.c.l.b16 %v88
    %v361 = vunpack.c.l.b16 %v89
    %v362 = vunpack.c.l.b16 %v90
    %v363 = vunpack.c.l.b16 %v91
    %v364 = vunpack.c.l.b16 %v92
    %v365 = vunpack.c.l.b16 %v93
    %v366 = vunpack.c.l.b16 %v94
    %v367 = vunpack.c.l.b16 %v95
    %v368 = vunpack.c.l.b16 %v96
    %v369 = vunpack.c.l.b16 %v97
    %v370 = vunpack.c.l.b16 %v98
    %v371 = vunpack.c.l.b16 %v99
    %v372 = vunpack.c.l.b16 %v100
    %v373 = vunpack.c.l.b16 %v101
    %v374 = vunpack.c.l.b16 %v102
    %v375 = vunpack.c.l.b16 %v103
    %v376 = vunpack.c.l.b16 %v104
    %v377 = vunpack.c.l.b16 %v105
    %v378 = vunpack.c.l.b16 %v106
    %v379 = vunpack.c.l.b16 %v107
    %v380 = vunpack.c.l.b16 %v108
    %v381 = vunpack.c.l.b16 %v109
    %v382 = vunpack.c.l.b16 %v110
    %v383 = vunpack.c.l.b16 %v111
    %v384 = vunpack.c.l.b16 %v112
    %v385 = vunpack.c.l.b16 %v113
    %v386 = vunpack.c.l.b16 %v114
    %v387 = vunpack.c.l.b16 %v115
    %v388 = vunpack.c.l.b16 %v116
    %v389 = vunpack.c.l.b16 %v117
    %v390 = vunpack.c.l.b16 %v118
    %v391 = vunpack.c.l.b16 %v119
    %v392 = vunpack.c.l.b16 %v120
    %v393 = vunpack.c.l.b16 %v121
    %v394 = vunpack.c.l.b16 %v122
    %v395 = vunpack.c.l.b16 %v123
    %v396 = vunpack.c.l.b16 %v124
    %v397 = vunpack.c.l.b16 %v125
    %v398 = vunpack.c.l.b16 %v126
    %v399 = vunpack.c.l.b16 %v127
    %v400 = vunpack.c.l.b16 %v128
    %v401 = vunpack.c.l.b16 %v129
    %v402 = vunpack.c.l.b16 %v130
    %v403 = vunpack.c.l.b16 %v131
    %v404 = vunpack.c.l.b16 %v132
    %v405 = vunpack.c.l.b16 %v133
    %v406 = vunpack.c.l.b16 %v134
    %v407 = vunpack.c.l.b16 %v135
    %v408 = vunpack.c.l.b16 %v136
    %v409 = vunpack.c.l.b16 %v137
    %v410 = vunpack.c.l.b16 %v138
    %v411 = vunpack.c.l.b16 %v139
    %v412 = vunpack.c.l.b16 %v140
    %v413 = vunpack.c.l.b16 %v141
    %v414 = vunpack.c.l.b16 %v142
    %v415 = vunpack.c.l.b16 %v143
    %v416 = vunpack.c.l.b16 %v144
    %v417 = vunpack.c.l.b16 %v145
    %v418 = vunpack.c.l.b16 %v146
    %v419 = vunpack.c.l.b16 %v147
    %v420 = vunpack.c.l.b16 %v148
    %v421 = vunpack.c.l.b16 %v149
    %v422 = vunpack.c.l.b16 %v150
    %v423 = vunpack.c.l.b16 %v151
    %v424 = vunpack.c.l.b16 %v152
    %v425 = vunpack.c.l.b16 %v153
    %v426 = vunpack.c.l.b16 %v154
    %v427 = vunpack.c.l.b16 %v155
    %v428 = vunpack.c.l.b16 %v156
    %v429 = vunpack.c.l.b16 %v157
    %v430 = vunpack.c.l.b16 %v158
    %v431 = vunpack.c.l.b16 %v159
    %v432 = vunpack.c.l.b16 %v160
    %v433 = vunpack.c.l.b16 %v161
    %v434 = vunpack.c.l.b16 %v162
    %v435 = vunpack.c.l.b16 %v163
    %v436 = vunpack.c.l.b16 %v164
    %v437 = vunpack.c.l.b16 %v165
    %v438 = vunpack.c.l.b16 %v166
    %v439 = vunpack.c.l.b16 %v167
    %v440 = vunpack.c.l.b16 %v168
    %v441 = vunpack.c.l.b16 %v169
    %v442 = vunpack.c.l.b16 %v170
    %v443 = vunpack.c.l.b16 %v171
    %v444 = vpack.c.b16 %v317, %v316
    %v445 = vpack.c.b16 %v319, %v318
    %v446 = vpack.c.b16 %v321, %v320
    %v447 = vpack.c.b16 %v323, %v322
    %v448 = vpack.c.b16 %v325, %v324
    %v449 = vpack.c.b16 %v327, %v326
    %v450 = vpack.c.b16 %v329, %v328
    %v451 = vpack.c.b16 %v331, %v330
    %v452 = vpack.c.b16 %v333, %v332
    %v453 = vpack.c.b16 %v335, %v334
    %v454 = vpack.c.b16 %v337, %v336
    %v455 = vpack.c.b16 %v339, %v338
    %v456 = vpack.c.b16 %v341, %v340
    %v457 = vpack.c.b16 %v343, %v342
    %v458 = vpack.c.b16 %v345, %v344
    %v459 = vpack.c.b16 %v347, %v346
    %v460 = vpack.c.b16 %v349, %v348
    %v461 = vpack.c.b16 %v351, %v350
    %v462 = vpack.c.b16 %v353, %v352
    %v463 = vpack.c.b16 %v355, %v354
    %v464 = vpack.c.b16 %v357, %v356
    %v465 = vpack.c.b16 %v359, %v358
    %v466 = vpack.c.b16 %v361, %v360
    %v467 = vpack.c.b16 %v363, %v362
    %v468 = vpack.c.b16 %v365, %v364
    %v469 = vpack.c.b16 %v367, %v366
    %v470 = vpack.c.b16 %v369, %v368
    %v471 = vpack.c.b16 %v371, %v370
    %v472 = vpack.c.b16 %v373, %v372
    %v473 = vpack.c.b16 %v375, %v374
    %v474 = vpack.c.b16 %v377, %v376
    %v475 = vpack.c.b16 %v379, %v378
    %v476 = vpack.c.b16 %v381, %v380
    %v477 = vpack.c.b16 %v383, %v382
    %v478 = vpack.c.b16 %v385, %v384
    %v479 = vpack.c.b16 %v387, %v386
    %v480 = vpack.c.b16 %v389, %v388
    %v481 = vpack.c.b16 %v391, %v390
    %v482 = vpack.c.b16 %v393, %v392
    %v483 = vpack.c.b16 %v395, %v394
    %v484 = vpack.c.b16 %v397, %v396
    %v485 = vpack.c.b16 %v399, %v398
    %v486 = vpack.c.b16 %v401, %v400
    %v487 = vpack.c.b16 %v403, %v402
    %v488 = vpack.c.b16 %v405, %v404
    %v489 = vpack.c.b16 %v407, %v406
    %v490 = vpack.c.b16 %v409, %v408
    %v491 = vpack.c.b16 %v411, %v410
    %v492 = vpack.c.b16 %v413, %v412
    %v493 = vpack.c.b16 %v415, %v414
    %v494 = vpack.c.b16 %v417, %v416
    %v495 = vpack.c.b16 %v419, %v418
    %v496 = vpack.c.b16 %v421, %v420
    %v497 = vpack.c.b16 %v423, %v422
    %v498 = vpack.c.b16 %v425, %v424
    %v499 = vpack.c.b16 %v427, %v426
    %v500 = vpack.c.b16 %v429, %v428
    %v501 = vpack.c.b16 %v431, %v430
    %v502 = vpack.c.b16 %v433, %v432
    %v503 = vpack.c.b16 %v435, %v434
    %v504 = vpack.c.b16 %v437, %v436
    %v505 = vpack.c.b16 %v439, %v438
    %v506 = vpack.c.b16 %v441, %v440
    %v507 = vpack.c.b16 %v443, %v442
    %v588 = vunpack.c.l.b16 %v172
    %v589 = vunpack.c.l.b16 %v173
    %v590 = vunpack.c.l.b16 %v174
    %v591 = vunpack.c.l.b16 %v175
    %v592 = vunpack.c.l.b16 %v176
    %v593 = vunpack.c.l.b16 %v177
    %v594 = vunpack.c.l.b16 %v178
    %v595 = vunpack.c.l.b16 %v179
    %v596 = vunpack.c.l.b16 %v180
    %v597 = vunpack.c.l.b16 %v181
    %v598 = vunpack.c.l.b16 %v182
    %v599 = vunpack.c.l.b16 %v183
    %v600 = vunpack.c.l.b16 %v184
    %v601 = vunpack.c.l.b16 %v185
    %v602 = vunpack.c.l.b16 %v186
    %v603 = vunpack.c.l.b16 %v187
    %v604 = vpack.c.b16 %v589, %v588
    %v605 = vpack.c.b16 %v591, %v590
    %v606 = vpack.c.b16 %v593, %v592
    %v607 = vpack.c.b16 %v595, %v594
    %v608 = vpack.c.b16 %v597, %v596
    %v609 = vpack.c.b16 %v599, %v598
    %v610 = vpack.c.b16 %v601, %v600
    %v611 = vpack.c.b16 %v603, %v602
    %620 = vmatpush.bf16.msra.mxu0 %v611
    %621 = vmatpush.bf16.msra.mxu0 %v610
    %622 = vmatpush.bf16.msra.mxu0 %v609
    %623 = vmatpush.bf16.msra.mxu0 %v608
    %624 = vmatpush.bf16.msra.mxu0 %v607
    %625 = vmatpush.bf16.msra.mxu0 %v606
    %626 = vmatpush.bf16.msra.mxu0 %v605
    %627 = vmatpush.bf16.msra.mxu0 %v604
    %628 = vmatmul.bf16.gmra.mxu0 %v444
    %v629 = vpop.f32.mrf.mxu0
    %v630 = vadd.f32 0.0, %v629
    %v631 = vpop.f32.mrf.mxu0
    %v632 = vadd.f32 0.0, %v631
    %633 = vmatmul.bf16.gmra.mxu0 %v445
    %v634 = vpop.f32.mrf.mxu0
    %v635 = vadd.f32 0.0, %v634
    %v636 = vpop.f32.mrf.mxu0
    %v637 = vadd.f32 0.0, %v636
    %638 = vmatmul.bf16.gmra.mxu0 %v446
    %v639 = vpop.f32.mrf.mxu0
    %v640 = vadd.f32 0.0, %v639
    %v641 = vpop.f32.mrf.mxu0
    %v642 = vadd.f32 0.0, %v641
    %643 = vmatmul.bf16.gmra.mxu0 %v447
    %v644 = vpop.f32.mrf.mxu0
    %v645 = vadd.f32 0.0, %v644
    %v646 = vpop.f32.mrf.mxu0
    %v647 = vadd.f32 0.0, %v646
    %648 = vmatmul.bf16.gmra.mxu0 %v448
    %v649 = vpop.f32.mrf.mxu0
    %v650 = vadd.f32 0.0, %v649
    %v651 = vpop.f32.mrf.mxu0
    %v652 = vadd.f32 0.0, %v651
    %653 = vmatmul.bf16.gmra.mxu0 %v449
    %v654 = vpop.f32.mrf.mxu0
    %v655 = vadd.f32 0.0, %v654
    %v656 = vpop.f32.mrf.mxu0
    %v657 = vadd.f32 0.0, %v656
    %658 = vmatmul.bf16.gmra.mxu0 %v450
    %v659 = vpop.f32.mrf.mxu0
    %v660 = vadd.f32 0.0, %v659
    %v661 = vpop.f32.mrf.mxu0
    %v662 = vadd.f32 0.0, %v661
    %663 = vmatmul.bf16.gmra.mxu0 %v451
    %v664 = vpop.f32.mrf.mxu0
    %v665 = vadd.f32 0.0, %v664
    %v666 = vpop.f32.mrf.mxu0
    %v667 = vadd.f32 0.0, %v666
    %668 = vmatmul.bf16.gmra.mxu0 %v452
    %v669 = vpop.f32.mrf.mxu0
    %v670 = vadd.f32 0.0, %v669
    %v671 = vpop.f32.mrf.mxu0
    %v672 = vadd.f32 0.0, %v671
    %673 = vmatmul.bf16.gmra.mxu0 %v453
    %v674 = vpop.f32.mrf.mxu0
    %v675 = vadd.f32 0.0, %v674
    %v676 = vpop.f32.mrf.mxu0
    %v677 = vadd.f32 0.0, %v676
    %678 = vmatmul.bf16.gmra.mxu0 %v454
    %v679 = vpop.f32.mrf.mxu0
    %v680 = vadd.f32 0.0, %v679
    %v681 = vpop.f32.mrf.mxu0
    %v682 = vadd.f32 0.0, %v681
    %683 = vmatmul.bf16.gmra.mxu0 %v455
    %v684 = vpop.f32.mrf.mxu0
    %v685 = vadd.f32 0.0, %v684
    %v686 = vpop.f32.mrf.mxu0
    %v687 = vadd.f32 0.0, %v686
    %688 = vmatmul.bf16.gmra.mxu0 %v456
    %v689 = vpop.f32.mrf.mxu0
    %v690 = vadd.f32 0.0, %v689
    %v691 = vpop.f32.mrf.mxu0
    %v692 = vadd.f32 0.0, %v691
    %693 = vmatmul.bf16.gmra.mxu0 %v457
    %v694 = vpop.f32.mrf.mxu0
    %v695 = vadd.f32 0.0, %v694
    %v696 = vpop.f32.mrf.mxu0
    %v697 = vadd.f32 0.0, %v696
    %698 = vmatmul.bf16.gmra.mxu0 %v458
    %v699 = vpop.f32.mrf.mxu0
    %v700 = vadd.f32 0.0, %v699
    %v701 = vpop.f32.mrf.mxu0
    %v702 = vadd.f32 0.0, %v701
    %703 = vmatmul.bf16.gmra.mxu0 %v459
    %v704 = vpop.f32.mrf.mxu0
    %v705 = vadd.f32 0.0, %v704
    %v706 = vpop.f32.mrf.mxu0
    %v707 = vadd.f32 0.0, %v706
    %708 = vmatmul.bf16.gmra.mxu0 %v460
    %v709 = vpop.f32.mrf.mxu0
    %v710 = vadd.f32 0.0, %v709
    %v711 = vpop.f32.mrf.mxu0
    %v712 = vadd.f32 0.0, %v711
    %713 = vmatmul.bf16.gmra.mxu0 %v461
    %v714 = vpop.f32.mrf.mxu0
    %v715 = vadd.f32 0.0, %v714
    %v716 = vpop.f32.mrf.mxu0
    %v717 = vadd.f32 0.0, %v716
    %718 = vmatmul.bf16.gmra.mxu0 %v462
    %v719 = vpop.f32.mrf.mxu0
    %v720 = vadd.f32 0.0, %v719
    %v721 = vpop.f32.mrf.mxu0
    %v722 = vadd.f32 0.0, %v721
    %723 = vmatmul.bf16.gmra.mxu0 %v463
    %v724 = vpop.f32.mrf.mxu0
    %v725 = vadd.f32 0.0, %v724
    %v726 = vpop.f32.mrf.mxu0
    %v727 = vadd.f32 0.0, %v726
    %728 = vmatmul.bf16.gmra.mxu0 %v464
    %v729 = vpop.f32.mrf.mxu0
    %v730 = vadd.f32 0.0, %v729
    %v731 = vpop.f32.mrf.mxu0
    %v732 = vadd.f32 0.0, %v731
    %733 = vmatmul.bf16.gmra.mxu0 %v465
    %v734 = vpop.f32.mrf.mxu0
    %v735 = vadd.f32 0.0, %v734
    %v736 = vpop.f32.mrf.mxu0
    %v737 = vadd.f32 0.0, %v736
    %738 = vmatmul.bf16.gmra.mxu0 %v466
    %v739 = vpop.f32.mrf.mxu0
    %v740 = vadd.f32 0.0, %v739
    %v741 = vpop.f32.mrf.mxu0
    %v742 = vadd.f32 0.0, %v741
    %743 = vmatmul.bf16.gmra.mxu0 %v467
    %v744 = vpop.f32.mrf.mxu0
    %v745 = vadd.f32 0.0, %v744
    %v746 = vpop.f32.mrf.mxu0
    %v747 = vadd.f32 0.0, %v746
    %748 = vmatmul.bf16.gmra.mxu0 %v468
    %v749 = vpop.f32.mrf.mxu0
    %v750 = vadd.f32 0.0, %v749
    %v751 = vpop.f32.mrf.mxu0
    %v752 = vadd.f32 0.0, %v751
    %753 = vmatmul.bf16.gmra.mxu0 %v469
    %v754 = vpop.f32.mrf.mxu0
    %v755 = vadd.f32 0.0, %v754
    %v756 = vpop.f32.mrf.mxu0
    %v757 = vadd.f32 0.0, %v756
    %758 = vmatmul.bf16.gmra.mxu0 %v470
    %v759 = vpop.f32.mrf.mxu0
    %v760 = vadd.f32 0.0, %v759
    %v761 = vpop.f32.mrf.mxu0
    %v762 = vadd.f32 0.0, %v761
    %763 = vmatmul.bf16.gmra.mxu0 %v471
    %v764 = vpop.f32.mrf.mxu0
    %v765 = vadd.f32 0.0, %v764
    %v766 = vpop.f32.mrf.mxu0
    %v767 = vadd.f32 0.0, %v766
    %768 = vmatmul.bf16.gmra.mxu0 %v472
    %v769 = vpop.f32.mrf.mxu0
    %v770 = vadd.f32 0.0, %v769
    %v771 = vpop.f32.mrf.mxu0
    %v772 = vadd.f32 0.0, %v771
    %773 = vmatmul.bf16.gmra.mxu0 %v473
    %v774 = vpop.f32.mrf.mxu0
    %v775 = vadd.f32 0.0, %v774
    %v776 = vpop.f32.mrf.mxu0
    %v777 = vadd.f32 0.0, %v776
    %778 = vmatmul.bf16.gmra.mxu0 %v474
    %v779 = vpop.f32.mrf.mxu0
    %v780 = vadd.f32 0.0, %v779
    %v781 = vpop.f32.mrf.mxu0
    %v782 = vadd.f32 0.0, %v781
    %783 = vmatmul.bf16.gmra.mxu0 %v475
    %v784 = vpop.f32.mrf.mxu0
    %v785 = vadd.f32 0.0, %v784
    %v786 = vpop.f32.mrf.mxu0
    %v787 = vadd.f32 0.0, %v786
    %788 = vmatmul.bf16.gmra.mxu0 %v476
    %v789 = vpop.f32.mrf.mxu0
    %v790 = vadd.f32 0.0, %v789
    %v791 = vpop.f32.mrf.mxu0
    %v792 = vadd.f32 0.0, %v791
    %793 = vmatmul.bf16.gmra.mxu0 %v477
    %v794 = vpop.f32.mrf.mxu0
    %v795 = vadd.f32 0.0, %v794
    %v796 = vpop.f32.mrf.mxu0
    %v797 = vadd.f32 0.0, %v796
    %798 = vmatmul.bf16.gmra.mxu0 %v478
    %v799 = vpop.f32.mrf.mxu0
    %v800 = vadd.f32 0.0, %v799
    %v801 = vpop.f32.mrf.mxu0
    %v802 = vadd.f32 0.0, %v801
    %803 = vmatmul.bf16.gmra.mxu0 %v479
    %v804 = vpop.f32.mrf.mxu0
    %v805 = vadd.f32 0.0, %v804
    %v806 = vpop.f32.mrf.mxu0
    %v807 = vadd.f32 0.0, %v806
    %808 = vmatmul.bf16.gmra.mxu0 %v480
    %v809 = vpop.f32.mrf.mxu0
    %v810 = vadd.f32 0.0, %v809
    %v811 = vpop.f32.mrf.mxu0
    %v812 = vadd.f32 0.0, %v811
    %813 = vmatmul.bf16.gmra.mxu0 %v481
    %v814 = vpop.f32.mrf.mxu0
    %v815 = vadd.f32 0.0, %v814
    %v816 = vpop.f32.mrf.mxu0
    %v817 = vadd.f32 0.0, %v816
    %818 = vmatmul.bf16.gmra.mxu0 %v482
    %v819 = vpop.f32.mrf.mxu0
    %v820 = vadd.f32 0.0, %v819
    %v821 = vpop.f32.mrf.mxu0
    %v822 = vadd.f32 0.0, %v821
    %823 = vmatmul.bf16.gmra.mxu0 %v483
    %v824 = vpop.f32.mrf.mxu0
    %v825 = vadd.f32 0.0, %v824
    %v826 = vpop.f32.mrf.mxu0
    %v827 = vadd.f32 0.0, %v826
    %828 = vmatmul.bf16.gmra.mxu0 %v484
    %v829 = vpop.f32.mrf.mxu0
    %v830 = vadd.f32 0.0, %v829
    %v831 = vpop.f32.mrf.mxu0
    %v832 = vadd.f32 0.0, %v831
    %833 = vmatmul.bf16.gmra.mxu0 %v485
    %v834 = vpop.f32.mrf.mxu0
    %v835 = vadd.f32 0.0, %v834
    %v836 = vpop.f32.mrf.mxu0
    %v837 = vadd.f32 0.0, %v836
    %838 = vmatmul.bf16.gmra.mxu0 %v486
    %v839 = vpop.f32.mrf.mxu0
    %v840 = vadd.f32 0.0, %v839
    %v841 = vpop.f32.mrf.mxu0
    %v842 = vadd.f32 0.0, %v841
    %843 = vmatmul.bf16.gmra.mxu0 %v487
    %v844 = vpop.f32.mrf.mxu0
    %v845 = vadd.f32 0.0, %v844
    %v846 = vpop.f32.mrf.mxu0
    %v847 = vadd.f32 0.0, %v846
    %848 = vmatmul.bf16.gmra.mxu0 %v488
    %v849 = vpop.f32.mrf.mxu0
    %v850 = vadd.f32 0.0, %v849
    %v851 = vpop.f32.mrf.mxu0
    %v852 = vadd.f32 0.0, %v851
    %853 = vmatmul.bf16.gmra.mxu0 %v489
    %v854 = vpop.f32.mrf.mxu0
    %v855 = vadd.f32 0.0, %v854
    %v856 = vpop.f32.mrf.mxu0
    %v857 = vadd.f32 0.0, %v856
    %858 = vmatmul.bf16.gmra.mxu0 %v490
    %v859 = vpop.f32.mrf.mxu0
    %v860 = vadd.f32 0.0, %v859
    %v861 = vpop.f32.mrf.mxu0
    %v862 = vadd.f32 0.0, %v861
    %863 = vmatmul.bf16.gmra.mxu0 %v491
    %v864 = vpop.f32.mrf.mxu0
    %v865 = vadd.f32 0.0, %v864
    %v866 = vpop.f32.mrf.mxu0
    %v867 = vadd.f32 0.0, %v866
    %868 = vmatmul.bf16.gmra.mxu0 %v492
    %v869 = vpop.f32.mrf.mxu0
    %v870 = vadd.f32 0.0, %v869
    %v871 = vpop.f32.mrf.mxu0
    %v872 = vadd.f32 0.0, %v871
    %873 = vmatmul.bf16.gmra.mxu0 %v493
    %v874 = vpop.f32.mrf.mxu0
    %v875 = vadd.f32 0.0, %v874
    %v876 = vpop.f32.mrf.mxu0
    %v877 = vadd.f32 0.0, %v876
    %878 = vmatmul.bf16.gmra.mxu0 %v494
    %v879 = vpop.f32.mrf.mxu0
    %v880 = vadd.f32 0.0, %v879
    %v881 = vpop.f32.mrf.mxu0
    %v882 = vadd.f32 0.0, %v881
    %883 = vmatmul.bf16.gmra.mxu0 %v495
    %v884 = vpop.f32.mrf.mxu0
    %v885 = vadd.f32 0.0, %v884
    %v886 = vpop.f32.mrf.mxu0
    %v887 = vadd.f32 0.0, %v886
    %888 = vmatmul.bf16.gmra.mxu0 %v496
    %v889 = vpop.f32.mrf.mxu0
    %v890 = vadd.f32 0.0, %v889
    %v891 = vpop.f32.mrf.mxu0
    %v892 = vadd.f32 0.0, %v891
    %893 = vmatmul.bf16.gmra.mxu0 %v497
    %v894 = vpop.f32.mrf.mxu0
    %v895 = vadd.f32 0.0, %v894
    %v896 = vpop.f32.mrf.mxu0
    %v897 = vadd.f32 0.0, %v896
    %898 = vmatmul.bf16.gmra.mxu0 %v498
    %v899 = vpop.f32.mrf.mxu0
    %v900 = vadd.f32 0.0, %v899
    %v901 = vpop.f32.mrf.mxu0
    %v902 = vadd.f32 0.0, %v901
    %903 = vmatmul.bf16.gmra.mxu0 %v499
    %v904 = vpop.f32.mrf.mxu0
    %v905 = vadd.f32 0.0, %v904
    %v906 = vpop.f32.mrf.mxu0
    %v907 = vadd.f32 0.0, %v906
    %908 = vmatmul.bf16.gmra.mxu0 %v500
    %v909 = vpop.f32.mrf.mxu0
    %v910 = vadd.f32 0.0, %v909
    %v911 = vpop.f32.mrf.mxu0
    %v912 = vadd.f32 0.0, %v911
    %913 = vmatmul.bf16.gmra.mxu0 %v501
    %v914 = vpop.f32.mrf.mxu0
    %v915 = vadd.f32 0.0, %v914
    %v916 = vpop.f32.mrf.mxu0
    %v917 = vadd.f32 0.0, %v916
    %918 = vmatmul.bf16.gmra.mxu0 %v502
    %v919 = vpop.f32.mrf.mxu0
    %v920 = vadd.f32 0.0, %v919
    %v921 = vpop.f32.mrf.mxu0
    %v922 = vadd.f32 0.0, %v921
    %923 = vmatmul.bf16.gmra.mxu0 %v503
    %v924 = vpop.f32.mrf.mxu0
    %v925 = vadd.f32 0.0, %v924
    %v926 = vpop.f32.mrf.mxu0
    %v927 = vadd.f32 0.0, %v926
    %928 = vmatmul.bf16.gmra.mxu0 %v504
    %v929 = vpop.f32.mrf.mxu0
    %v930 = vadd.f32 0.0, %v929
    %v931 = vpop.f32.mrf.mxu0
    %v932 = vadd.f32 0.0, %v931
    %933 = vmatmul.bf16.gmra.mxu0 %v505
    %v934 = vpop.f32.mrf.mxu0
    %v935 = vadd.f32 0.0, %v934
    %v936 = vpop.f32.mrf.mxu0
    %v937 = vadd.f32 0.0, %v936
    %938 = vmatmul.bf16.gmra.mxu0 %v506
    %v939 = vpop.f32.mrf.mxu0
    %v940 = vadd.f32 0.0, %v939
    %v941 = vpop.f32.mrf.mxu0
    %v942 = vadd.f32 0.0, %v941
    %943 = vmatmul.bf16.gmra.mxu0 %v507
    %v944 = vpop.f32.mrf.mxu0
    %v945 = vadd.f32 0.0, %v944
    %v946 = vpop.f32.mrf.mxu0
    %v947 = vadd.f32 0.0, %v946
    %948 = vdwg.mxu0
    %v949 = vadd.f32 %v630, %v632
    %v950 = vadd.f32 %v949, %v635
    %v951 = vadd.f32 %v950, %v637
    %v952 = vadd.f32 %v951, %v640
    %v953 = vadd.f32 %v952, %v642
    %v954 = vadd.f32 %v953, %v645
    %v955 = vadd.f32 %v954, %v647
    %v956 = vadd.f32 %v955, %v650
    %v957 = vadd.f32 %v956, %v652
    %v958 = vadd.f32 %v957, %v655
    %v959 = vadd.f32 %v958, %v657
    %v960 = vadd.f32 %v959, %v660
    %v961 = vadd.f32 %v960, %v662
    %v962 = vadd.f32 %v961, %v665
    %v963 = vadd.f32 %v962, %v667
    %v964 = vadd.f32 %v963, %v670
    %v965 = vadd.f32 %v964, %v672
    %v966 = vadd.f32 %v965, %v675
    %v967 = vadd.f32 %v966, %v677
    %v968 = vadd.f32 %v967, %v680
    %v969 = vadd.f32 %v968, %v682
    %v970 = vadd.f32 %v969, %v685
    %v971 = vadd.f32 %v970, %v687
    %v972 = vadd.f32 %v971, %v690
    %v973 = vadd.f32 %v972, %v692
    %v974 = vadd.f32 %v973, %v695
    %v975 = vadd.f32 %v974, %v697
    %v976 = vadd.f32 %v975, %v700
    %v977 = vadd.f32 %v976, %v702
    %v978 = vadd.f32 %v977, %v705
    %v979 = vadd.f32 %v978, %v707
    %v980 = vadd.f32 %v979, %v710
    %v981 = vadd.f32 %v980, %v712
    %v982 = vadd.f32 %v981, %v715
    %v983 = vadd.f32 %v982, %v717
    %v984 = vadd.f32 %v983, %v720
    %v985 = vadd.f32 %v984, %v722
    %v986 = vadd.f32 %v985, %v725
    %v987 = vadd.f32 %v986, %v727
    %v988 = vadd.f32 %v987, %v730
    %v989 = vadd.f32 %v988, %v732
    %v990 = vadd.f32 %v989, %v735
    %v991 = vadd.f32 %v990, %v737
    %v992 = vadd.f32 %v991, %v740
    %v993 = vadd.f32 %v992, %v742
    %v994 = vadd.f32 %v993, %v745
    %v995 = vadd.f32 %v994, %v747
    %v996 = vadd.f32 %v995, %v750
    %v997 = vadd.f32 %v996, %v752
    %v998 = vadd.f32 %v997, %v755
    %v999 = vadd.f32 %v998, %v757
    %v1000 = vadd.f32 %v999, %v760
    %v1001 = vadd.f32 %v1000, %v762
    %v1002 = vadd.f32 %v1001, %v765
    %v1003 = vadd.f32 %v1002, %v767
    %v1004 = vadd.f32 %v1003, %v770
    %v1005 = vadd.f32 %v1004, %v772
    %v1006 = vadd.f32 %v1005, %v775
    %v1007 = vadd.f32 %v1006, %v777
    %v1008 = vadd.f32 %v1007, %v780
    %v1009 = vadd.f32 %v1008, %v782
    %v1010 = vadd.f32 %v1009, %v785
    %v1011 = vadd.f32 %v1010, %v787
    %v1012 = vadd.f32 %v1011, %v790
    %v1013 = vadd.f32 %v1012, %v792
    %v1014 = vadd.f32 %v1013, %v795
    %v1015 = vadd.f32 %v1014, %v797
    %v1016 = vadd.f32 %v1015, %v800
    %v1017 = vadd.f32 %v1016, %v802
    %v1018 = vadd.f32 %v1017, %v805
    %v1019 = vadd.f32 %v1018, %v807
    %v1020 = vadd.f32 %v1019, %v810
    %v1021 = vadd.f32 %v1020, %v812
    %v1022 = vadd.f32 %v1021, %v815
    %v1023 = vadd.f32 %v1022, %v817
    %v1024 = vadd.f32 %v1023, %v820
    %v1025 = vadd.f32 %v1024, %v822
    %v1026 = vadd.f32 %v1025, %v825
    %v1027 = vadd.f32 %v1026, %v827
    %v1028 = vadd.f32 %v1027, %v830
    %v1029 = vadd.f32 %v1028, %v832
    %v1030 = vadd.f32 %v1029, %v835
    %v1031 = vadd.f32 %v1030, %v837
    %v1032 = vadd.f32 %v1031, %v840
    %v1033 = vadd.f32 %v1032, %v842
    %v1034 = vadd.f32 %v1033, %v845
    %v1035 = vadd.f32 %v1034, %v847
    %v1036 = vadd.f32 %v1035, %v850
    %v1037 = vadd.f32 %v1036, %v852
    %v1038 = vadd.f32 %v1037, %v855
    %v1039 = vadd.f32 %v1038, %v857
    %v1040 = vadd.f32 %v1039, %v860
    %v1041 = vadd.f32 %v1040, %v862
    %v1042 = vadd.f32 %v1041, %v865
    %v1043 = vadd.f32 %v1042, %v867
    %v1044 = vadd.f32 %v1043, %v870
    %v1045 = vadd.f32 %v1044, %v872
    %v1046 = vadd.f32 %v1045, %v875
    %v1047 = vadd.f32 %v1046, %v877
    %v1048 = vadd.f32 %v1047, %v880
    %v1049 = vadd.f32 %v1048, %v882
    %v1050 = vadd.f32 %v1049, %v885
    %v1051 = vadd.f32 %v1050, %v887
    %v1052 = vadd.f32 %v1051, %v890
    %v1053 = vadd.f32 %v1052, %v892
    %v1054 = vadd.f32 %v1053, %v895
    %v1055 = vadd.f32 %v1054, %v897
    %v1056 = vadd.f32 %v1055, %v900
    %v1057 = vadd.f32 %v1056, %v902
    %v1058 = vadd.f32 %v1057, %v905
    %v1059 = vadd.f32 %v1058, %v907
    %v1060 = vadd.f32 %v1059, %v910
    %v1061 = vadd.f32 %v1060, %v912
    %v1062 = vadd.f32 %v1061, %v915
    %v1063 = vadd.f32 %v1062, %v917
    %v1064 = vadd.f32 %v1063, %v920
    %v1065 = vadd.f32 %v1064, %v922
    %v1066 = vadd.f32 %v1065, %v925
    %v1067 = vadd.f32 %v1066, %v927
    %v1068 = vadd.f32 %v1067, %v930
    %v1069 = vadd.f32 %v1068, %v932
    %v1070 = vadd.f32 %v1069, %v935
    %v1071 = vadd.f32 %v1070, %v937
    %v1072 = vadd.f32 %v1071, %v940
    %v1073 = vadd.f32 %v1072, %v942
    %v1074 = vadd.f32 %v1073, %v945
    %v1075 = vadd.f32 %v1074, %v947
    %v1076 = vrot.slane %v1075, 4
    %v1077 = vadd.f32 %v1075, %v1076
    %v1078 = vrot.slane %v1077, 2
    %v1079 = vadd.f32 %v1077, %v1078
    %v1080 = vrot.slane %v1079, 1
    %v1081 = vadd.f32 %v1079, %v1080
    %v1082 = vmul.f32 %v630, %v630
    %v1083 = vmul.f32 %v632, %v632
    %v1084 = vmul.f32 %v635, %v635
    %v1085 = vmul.f32 %v637, %v637
    %v1086 = vmul.f32 %v640, %v640
    %v1087 = vmul.f32 %v642, %v642
    %v1088 = vmul.f32 %v645, %v645
    %v1089 = vmul.f32 %v647, %v647
    %v1090 = vmul.f32 %v650, %v650
    %v1091 = vmul.f32 %v652, %v652
    %v1092 = vmul.f32 %v655, %v655
    %v1093 = vmul.f32 %v657, %v657
    %v1094 = vmul.f32 %v660, %v660
    %v1095 = vmul.f32 %v662, %v662
    %v1096 = vmul.f32 %v665, %v665
    %v1097 = vmul.f32 %v667, %v667
    %v1098 = vmul.f32 %v670, %v670
    %v1099 = vmul.f32 %v672, %v672
    %v1100 = vmul.f32 %v675, %v675
    %v1101 = vmul.f32 %v677, %v677
    %v1102 = vmul.f32 %v680, %v680
    %v1103 = vmul.f32 %v682, %v682
    %v1104 = vmul.f32 %v685, %v685
    %v1105 = vmul.f32 %v687, %v687
    %v1106 = vmul.f32 %v690, %v690
    %v1107 = vmul.f32 %v692, %v692
    %v1108 = vmul.f32 %v695, %v695
    %v1109 = vmul.f32 %v697, %v697
    %v1110 = vmul.f32 %v700, %v700
    %v1111 = vmul.f32 %v702, %v702
    %v1112 = vmul.f32 %v705, %v705
    %v1113 = vmul.f32 %v707, %v707
    %v1114 = vmul.f32 %v710, %v710
    %v1115 = vmul.f32 %v712, %v712
    %v1116 = vmul.f32 %v715, %v715
    %v1117 = vmul.f32 %v717, %v717
    %v1118 = vmul.f32 %v720, %v720
    %v1119 = vmul.f32 %v722, %v722
    %v1120 = vmul.f32 %v725, %v725
    %v1121 = vmul.f32 %v727, %v727
    %v1122 = vmul.f32 %v730, %v730
    %v1123 = vmul.f32 %v732, %v732
    %v1124 = vmul.f32 %v735, %v735
    %v1125 = vmul.f32 %v737, %v737
    %v1126 = vmul.f32 %v740, %v740
    %v1127 = vmul.f32 %v742, %v742
    %v1128 = vmul.f32 %v745, %v745
    %v1129 = vmul.f32 %v747, %v747
    %v1130 = vmul.f32 %v750, %v750
    %v1131 = vmul.f32 %v752, %v752
    %v1132 = vmul.f32 %v755, %v755
    %v1133 = vmul.f32 %v757, %v757
    %v1134 = vmul.f32 %v760, %v760
    %v1135 = vmul.f32 %v762, %v762
    %v1136 = vmul.f32 %v765, %v765
    %v1137 = vmul.f32 %v767, %v767
    %v1138 = vmul.f32 %v770, %v770
    %v1139 = vmul.f32 %v772, %v772
    %v1140 = vmul.f32 %v775, %v775
    %v1141 = vmul.f32 %v777, %v777
    %v1142 = vmul.f32 %v780, %v780
    %v1143 = vmul.f32 %v782, %v782
    %v1144 = vmul.f32 %v785, %v785
    %v1145 = vmul.f32 %v787, %v787
    %v1146 = vmul.f32 %v790, %v790
    %v1147 = vmul.f32 %v792, %v792
    %v1148 = vmul.f32 %v795, %v795
    %v1149 = vmul.f32 %v797, %v797
    %v1150 = vmul.f32 %v800, %v800
    %v1151 = vmul.f32 %v802, %v802
    %v1152 = vmul.f32 %v805, %v805
    %v1153 = vmul.f32 %v807, %v807
    %v1154 = vmul.f32 %v810, %v810
    %v1155 = vmul.f32 %v812, %v812
    %v1156 = vmul.f32 %v815, %v815
    %v1157 = vmul.f32 %v817, %v817
    %v1158 = vmul.f32 %v820, %v820
    %v1159 = vmul.f32 %v822, %v822
    %v1160 = vmul.f32 %v825, %v825
    %v1161 = vmul.f32 %v827, %v827
    %v1162 = vmul.f32 %v830, %v830
    %v1163 = vmul.f32 %v832, %v832
    %v1164 = vmul.f32 %v835, %v835
    %v1165 = vmul.f32 %v837, %v837
    %v1166 = vmul.f32 %v840, %v840
    %v1167 = vmul.f32 %v842, %v842
    %v1168 = vmul.f32 %v845, %v845
    %v1169 = vmul.f32 %v847, %v847
    %v1170 = vmul.f32 %v850, %v850
    %v1171 = vmul.f32 %v852, %v852
    %v1172 = vmul.f32 %v855, %v855
    %v1173 = vmul.f32 %v857, %v857
    %v1174 = vmul.f32 %v860, %v860
    %v1175 = vmul.f32 %v862, %v862
    %v1176 = vmul.f32 %v865, %v865
    %v1177 = vmul.f32 %v867, %v867
    %v1178 = vmul.f32 %v870, %v870
    %v1179 = vmul.f32 %v872, %v872
    %v1180 = vmul.f32 %v875, %v875
    %v1181 = vmul.f32 %v877, %v877
    %v1182 = vmul.f32 %v880, %v880
    %v1183 = vmul.f32 %v882, %v882
    %v1184 = vmul.f32 %v885, %v885
    %v1185 = vmul.f32 %v887, %v887
    %v1186 = vmul.f32 %v890, %v890
    %v1187 = vmul.f32 %v892, %v892
    %v1188 = vmul.f32 %v895, %v895
    %v1189 = vmul.f32 %v897, %v897
    %v1190 = vmul.f32 %v900, %v900
    %v1191 = vmul.f32 %v902, %v902
    %v1192 = vmul.f32 %v905, %v905
    %v1193 = vmul.f32 %v907, %v907
    %v1194 = vmul.f32 %v910, %v910
    %v1195 = vmul.f32 %v912, %v912
    %v1196 = vmul.f32 %v915, %v915
    %v1197 = vmul.f32 %v917, %v917
    %v1198 = vmul.f32 %v920, %v920
    %v1199 = vmul.f32 %v922, %v922
    %v1200 = vmul.f32 %v925, %v925
    %v1201 = vmul.f32 %v927, %v927
    %v1202 = vmul.f32 %v930, %v930
    %v1203 = vmul.f32 %v932, %v932
    %v1204 = vmul.f32 %v935, %v935
    %v1205 = vmul.f32 %v937, %v937
    %v1206 = vmul.f32 %v940, %v940
    %v1207 = vmul.f32 %v942, %v942
    %v1208 = vmul.f32 %v945, %v945
    %v1209 = vmul.f32 %v947, %v947
    %v1210 = vadd.f32 %v1082, %v1083
    %v1211 = vadd.f32 %v1210, %v1084
    %v1212 = vadd.f32 %v1211, %v1085
    %v1213 = vadd.f32 %v1212, %v1086
    %v1214 = vadd.f32 %v1213, %v1087
    %v1215 = vadd.f32 %v1214, %v1088
    %v1216 = vadd.f32 %v1215, %v1089
    %v1217 = vadd.f32 %v1216, %v1090
    %v1218 = vadd.f32 %v1217, %v1091
    %v1219 = vadd.f32 %v1218, %v1092
    %v1220 = vadd.f32 %v1219, %v1093
    %v1221 = vadd.f32 %v1220, %v1094
    %v1222 = vadd.f32 %v1221, %v1095
    %v1223 = vadd.f32 %v1222, %v1096
    %v1224 = vadd.f32 %v1223, %v1097
    %v1225 = vadd.f32 %v1224, %v1098
    %v1226 = vadd.f32 %v1225, %v1099
    %v1227 = vadd.f32 %v1226, %v1100
    %v1228 = vadd.f32 %v1227, %v1101
    %v1229 = vadd.f32 %v1228, %v1102
    %v1230 = vadd.f32 %v1229, %v1103
    %v1231 = vadd.f32 %v1230, %v1104
    %v1232 = vadd.f32 %v1231, %v1105
    %v1233 = vadd.f32 %v1232, %v1106
    %v1234 = vadd.f32 %v1233, %v1107
    %v1235 = vadd.f32 %v1234, %v1108
    %v1236 = vadd.f32 %v1235, %v1109
    %v1237 = vadd.f32 %v1236, %v1110
    %v1238 = vadd.f32 %v1237, %v1111
    %v1239 = vadd.f32 %v1238, %v1112
    %v1240 = vadd.f32 %v1239, %v1113
    %v1241 = vadd.f32 %v1240, %v1114
    %v1242 = vadd.f32 %v1241, %v1115
    %v1243 = vadd.f32 %v1242, %v1116
    %v1244 = vadd.f32 %v1243, %v1117
    %v1245 = vadd.f32 %v1244, %v1118
    %v1246 = vadd.f32 %v1245, %v1119
    %v1247 = vadd.f32 %v1246, %v1120
    %v1248 = vadd.f32 %v1247, %v1121
    %v1249 = vadd.f32 %v1248, %v1122
    %v1250 = vadd.f32 %v1249, %v1123
    %v1251 = vadd.f32 %v1250, %v1124
    %v1252 = vadd.f32 %v1251, %v1125
    %v1253 = vadd.f32 %v1252, %v1126
    %v1254 = vadd.f32 %v1253, %v1127
    %v1255 = vadd.f32 %v1254, %v1128
    %v1256 = vadd.f32 %v1255, %v1129
    %v1257 = vadd.f32 %v1256, %v1130
    %v1258 = vadd.f32 %v1257, %v1131
    %v1259 = vadd.f32 %v1258, %v1132
    %v1260 = vadd.f32 %v1259, %v1133
    %v1261 = vadd.f32 %v1260, %v1134
    %v1262 = vadd.f32 %v1261, %v1135
    %v1263 = vadd.f32 %v1262, %v1136
    %v1264 = vadd.f32 %v1263, %v1137
    %v1265 = vadd.f32 %v1264, %v1138
    %v1266 = vadd.f32 %v1265, %v1139
    %v1267 = vadd.f32 %v1266, %v1140
    %v1268 = vadd.f32 %v1267, %v1141
    %v1269 = vadd.f32 %v1268, %v1142
    %v1270 = vadd.f32 %v1269, %v1143
    %v1271 = vadd.f32 %v1270, %v1144
    %v1272 = vadd.f32 %v1271, %v1145
    %v1273 = vadd.f32 %v1272, %v1146
    %v1274 = vadd.f32 %v1273, %v1147
    %v1275 = vadd.f32 %v1274, %v1148
    %v1276 = vadd.f32 %v1275, %v1149
    %v1277 = vadd.f32 %v1276, %v1150
    %v1278 = vadd.f32 %v1277, %v1151
    %v1279 = vadd.f32 %v1278, %v1152
    %v1280 = vadd.f32 %v1279, %v1153
    %v1281 = vadd.f32 %v1280, %v1154
    %v1282 = vadd.f32 %v1281, %v1155
    %v1283 = vadd.f32 %v1282, %v1156
    %v1284 = vadd.f32 %v1283, %v1157
    %v1285 = vadd.f32 %v1284, %v1158
    %v1286 = vadd.f32 %v1285, %v1159
    %v1287 = vadd.f32 %v1286, %v1160
    %v1288 = vadd.f32 %v1287, %v1161
    %v1289 = vadd.f32 %v1288, %v1162
    %v1290 = vadd.f32 %v1289, %v1163
    %v1291 = vadd.f32 %v1290, %v1164
    %v1292 = vadd.f32 %v1291, %v1165
    %v1293 = vadd.f32 %v1292, %v1166
    %v1294 = vadd.f32 %v1293, %v1167
    %v1295 = vadd.f32 %v1294, %v1168
    %v1296 = vadd.f32 %v1295, %v1169
    %v1297 = vadd.f32 %v1296, %v1170
    %v1298 = vadd.f32 %v1297, %v1171
    %v1299 = vadd.f32 %v1298, %v1172
    %v1300 = vadd.f32 %v1299, %v1173
    %v1301 = vadd.f32 %v1300, %v1174
    %v1302 = vadd.f32 %v1301, %v1175
    %v1303 = vadd.f32 %v1302, %v1176
    %v1304 = vadd.f32 %v1303, %v1177
    %v1305 = vadd.f32 %v1304, %v1178
    %v1306 = vadd.f32 %v1305, %v1179
    %v1307 = vadd.f32 %v1306, %v1180
    %v1308 = vadd.f32 %v1307, %v1181
    %v1309 = vadd.f32 %v1308, %v1182
    %v1310 = vadd.f32 %v1309, %v1183
    %v1311 = vadd.f32 %v1310, %v1184
    %v1312 = vadd.f32 %v1311, %v1185
    %v1313 = vadd.f32 %v1312, %v1186
    %v1314 = vadd.f32 %v1313, %v1187
    %v1315 = vadd.f32 %v1314, %v1188
    %v1316 = vadd.f32 %v1315, %v1189
    %v1317 = vadd.f32 %v1316, %v1190
    %v1318 = vadd.f32 %v1317, %v1191
    %v1319 = vadd.f32 %v1318, %v1192
    %v1320 = vadd.f32 %v1319, %v1193
    %v1321 = vadd.f32 %v1320, %v1194
    %v1322 = vadd.f32 %v1321, %v1195
    %v1323 = vadd.f32 %v1322, %v1196
    %v1324 = vadd.f32 %v1323, %v1197
    %v1325 = vadd.f32 %v1324, %v1198
    %v1326 = vadd.f32 %v1325, %v1199
    %v1327 = vadd.f32 %v1326, %v1200
    %v1328 = vadd.f32 %v1327, %v1201
    %v1329 = vadd.f32 %v1328, %v1202
    %v1330 = vadd.f32 %v1329, %v1203
    %v1331 = vadd.f32 %v1330, %v1204
    %v1332 = vadd.f32 %v1331, %v1205
    %v1333 = vadd.f32 %v1332, %v1206
    %v1334 = vadd.f32 %v1333, %v1207
    %v1335 = vadd.f32 %v1334, %v1208
    %v1336 = vadd.f32 %v1335, %v1209
    %v1337 = vrot.slane %v1336, 4
    %v1338 = vadd.f32 %v1336, %v1337
    %v1339 = vrot.slane %v1338, 2
    %v1340 = vadd.f32 %v1338, %v1339
    %v1341 = vrot.slane %v1340, 1
    %v1342 = vadd.f32 %v1340, %v1341
    %v1343 = vlaneseq
    %v1344 = vshrl.u32 %v1343, 7
    %vm1345 = vcmp.eq.s32.totalorder %v1344, 0
    %vm1346 = vcmp.eq.s32.totalorder %v1344, 1
    %v1347 = vsel %vm1346, %v1342, 0.0
    %v1348 = vsel %vm1345, %v1081, %v1347
    %1349 = vst [vmem:[#allocation7] sm:$0xff] %v1348
    // Predicated region
    $region18: #{tpu_custom_call.1} parent=1 // pred_check
      _
    $region19: #{tpu_custom_call.1} parent=1 // pred_check_branch
      %1351 = sbr.rel (0) target = $region21
    $region20: #{tpu_custom_call.1} parent=1 // pred_region
      %1353 = vsyncadd [#allocation4], 0
      %s1355 = sshll.u32 [#allocation7], 4
      %s1356 = int_to_ptr.vmem [resolvable:$true] %s1355
      %s1357 = sshll.u32 %s2, 4
      %s1358 = int_to_ptr.hbm [resolvable:$true] %s1357
      %1360 = dma.vmem_to_hbm [thread:$0]  %s1356, 128, %s1358, [#allocation4]
    $region21: #{tpu_custom_call.1} parent=1 // pred_fallthru
      _
    // Predicated region
    $region22: #{tpu_custom_call.1} parent=1 // pred_check
      _
    $region23: #{tpu_custom_call.1} parent=1 // pred_check_branch
      %1362 = sbr.rel (0) target = $region25
    $region24: #{tpu_custom_call.1} parent=1 // pred_region
      %1364 = dma.done [#allocation4], 128
    $region25: #{tpu_custom_call.1} parent=1 // pred_fallthru
      _
    %1365 = vsyncpa [#allocation3], 1
    %1366 = vsyncpa [#allocation6], 1
    %1367 = vsyncpa [#allocation4], 1

</llo_original>
